<compile_context>
chip_gen: v7x
topology: tpu7x:2x2x1
jax: 0.10.0
libtpu: 0.0.40
codegen_flags: <defaults>
</compile_context>

<pallas_src>
import math

import jax
import jax.numpy as jnp
from jax.experimental import pallas as pl
from jax.experimental.pallas import tpu as pltpu

_ROW_ALIGN = 8  # sublane alignment for batch-tiled blocks


def _round_up(x, m):
    return (x + m - 1) // m * m


# ----------------------------------------------------------------------------
# Kernel
# ----------------------------------------------------------------------------
def _generator_kernel(x_ref, w1_ref, bias_ref, w2_ref, o_ref):
    """ReLU((ReLU(x@W1 + b1)) @ W2 + b2) for one batch tile.

    x_ref:   (tm, d_in)   f32   (cast to bf16 on-chip for the MXU)
    w1_ref:  (d_in, d_hid) bf16
    bias_ref:(2, P)        f32   (row 0 = b1[:d_hid], row 1 = b2[:d_out])
    w2_ref:  (d_hid, d_out) bf16
    o_ref:   (tm, d_out)   f32
    """
    d_hid = w1_ref.shape[1]
    d_out = w2_ref.shape[1]

    x = x_ref[...].astype(jnp.bfloat16)
    # Layer 1: bf16 MXU matmul, f32 accumulate; bias + ReLU on the VPU in f32.
    h = jnp.dot(x, w1_ref[...], preferred_element_type=jnp.float32)
    h = jnp.maximum(h + bias_ref[0:1, :d_hid], 0.0)
    # Layer 2: same pattern; cast activations to bf16 for the MXU.
    y = jnp.dot(h.astype(jnp.bfloat16), w2_ref[...],
                preferred_element_type=jnp.float32)
    o_ref[...] = jnp.maximum(y + bias_ref[1:2, :d_out], 0.0)


# ----------------------------------------------------------------------------
# Parameter prep / wrapper
# ----------------------------------------------------------------------------
def init_generator_params(key, gen_arch):
    """nn.Linear-style init (uniform +/- 1/sqrt(fan_in)); weights stored as
    (fan_in, fan_out) so the kernel computes y = x @ W + b directly."""
    d_in, d_hid, d_out = gen_arch
    k1, k2, k3, k4 = jax.random.split(key, 4)
    bound1 = 1.0 / math.sqrt(d_in)
    bound2 = 1.0 / math.sqrt(d_hid)
    w1 = jax.random.uniform(k1, (d_in, d_hid), jnp.float32, -bound1, bound1)
    b1 = jax.random.uniform(k2, (d_hid,), jnp.float32, -bound1, bound1)
    w2 = jax.random.uniform(k3, (d_hid, d_out), jnp.float32, -bound2, bound2)
    b2 = jax.random.uniform(k4, (d_out,), jnp.float32, -bound2, bound2)
    return w1, b1, w2, b2


def prepare_generator_params(w1, b1, w2, b2):
    """One-time layout prep: cast weights to bf16 for the MXU and fold both
    biases into a single (2, P) f32 operand.  No lane padding — weight blocks
    equal the full array dims, so the (8,128) tiling rule does not apply."""
    d_in, d_hid = w1.shape
    d_out = w2.shape[1]
    p = max(d_hid, d_out)
    bias = (jnp.zeros((2, p), jnp.float32)
            .at[0, :d_hid].set(b1)
            .at[1, :d_out].set(b2))
    return dict(w1=w1.astype(jnp.bfloat16), w2=w2.astype(jnp.bfloat16),
                bias=bias, d_out=d_out)


def generator_forward(x, params, *, block_rows=2048):
    """x: (B, d_in) f32 -> (B, d_out) f32.

    Single pallas_call over the whole batch, tiled in rows; weights/biases stay
    resident in VMEM.  For B <= block_rows the whole batch is one tile (no pad,
    no slice, no extra XLA dispatches).  For larger B the batch is tiled with
    block_rows rows per step; the batch axis is "parallel" so on v7x the tiles
    are split across the two TensorCores (pick block_rows <= ceil(B/2) there).
    """
    w1, w2, bias = params["w1"], params["w2"], params["bias"]
    d_out = params["d_out"]
    B, d_in = x.shape
    d_hid = w1.shape[1]

    block_rows = _round_up(max(block_rows, _ROW_ALIGN), _ROW_ALIGN)
    if B <= block_rows:
        tm, b_pad = B, B                      # one full-batch tile, no padding
    else:
        tm = block_rows
        b_pad = _round_up(B, tm)
        if b_pad != B:
            x = jnp.pad(x, ((0, b_pad - B), (0, 0)))

    flops = 2 * b_pad * (d_in * d_hid + d_hid * d_out)
    bytes_accessed = (x.size * 4 + w1.size * 2 + w2.size * 2 + bias.size * 4
                      + b_pad * d_out * 4)

    out = pl.pallas_call(
        _generator_kernel,
        out_shape=jax.ShapeDtypeStruct((b_pad, d_out), jnp.float32),
        grid=(b_pad // tm,),
        in_specs=[
            pl.BlockSpec((tm, d_in), lambda i: (i, 0)),            # batch-tiled x
            pl.BlockSpec((d_in, d_hid), lambda i: (0, 0)),         # resident W1
            pl.BlockSpec((2, bias.shape[1]), lambda i: (0, 0)),    # resident biases
            pl.BlockSpec((d_hid, d_out), lambda i: (0, 0)),        # resident W2
        ],
        out_specs=pl.BlockSpec((tm, d_out), lambda i: (i, 0)),     # no lane padding
        compiler_params=pltpu.CompilerParams(
            dimension_semantics=("parallel",),   # shard batch tiles across TCs (v7x)
        ),
        cost_estimate=pl.CostEstimate(
            flops=flops, transcendentals=0, bytes_accessed=bytes_accessed),
    )(x, w1, bias, w2)
    return out if b_pad == B else out[:B]


# ----------------------------------------------------------------------------
# References
# ----------------------------------------------------------------------------
def reference_forward_f32(x, w1, b1, w2, b2):
    h = jnp.maximum(x @ w1 + b1, 0.0)
    return jnp.maximum(h @ w2 + b2, 0.0)


def reference_forward_bf16(x, w1, b1, w2, b2):
    # Same bf16-operand / f32-accumulate arithmetic as the kernel.
    h = jnp.dot(x.astype(jnp.bfloat16), w1.astype(jnp.bfloat16),
                preferred_element_type=jnp.float32) + b1
    h = jnp.maximum(h, 0.0)
    y = jnp.dot(h.astype(jnp.bfloat16), w2.astype(jnp.bfloat16),
                preferred_element_type=jnp.float32) + b2
    return jnp.maximum(y, 0.0)


if __name__ == "__main__":
    key = jax.random.PRNGKey(0)
    gen_arch = [16, 32, 2]   # [noise_dim, hidden_dim, output_dim] -> samples in R^2
    batch = 16               # small demo shape

    kx, kp = jax.random.split(key)
    # Noise input (GAN sampling noise is generated host-side with jax.random).
    x = jax.random.normal(kx, (batch, gen_arch[0]), jnp.float32)
    w1, b1, w2, b2 = init_generator_params(kp, gen_arch)
    params = prepare_generator_params(w1, b1, w2, b2)

    ref_bf16 = reference_forward_bf16(x, w1, b1, w2, b2)
    ref_f32 = reference_forward_f32(x, w1, b1, w2, b2)

    # Single-tile path (whole batch in one grid step).
    out = jax.block_until_ready(generator_forward(x, params))
    assert out.shape == (batch, gen_arch[2])
    assert out.dtype == jnp.float32
    assert jnp.allclose(out, ref_bf16, atol=1e-3, rtol=1e-3), "mismatch vs bf16 reference"
    assert jnp.allclose(out, ref_f32, atol=5e-2, rtol=5e-2), "mismatch vs f32 reference"
    assert bool(jnp.all(out >= 0.0))   # final ReLU

    # Tiled path (exercise grid > 1 with the same data).
    out_tiled = jax.block_until_ready(generator_forward(x, params, block_rows=8))
    assert out_tiled.shape == (batch, gen_arch[2])
    assert jnp.allclose(out_tiled, ref_bf16, atol=1e-3, rtol=1e-3), "tiled mismatch"

    print("KERNEL_OK")
</pallas_src>

<mosaic_0001>
module attributes {stable_mosaic.version = 11 : i64} {
  func.func @_generator_kernel(%arg0: i32, %arg1: memref<16x16xf32, #tpu.memory_space<vmem>>, %arg2: memref<16x32xbf16, #tpu.memory_space<vmem>>, %arg3: memref<2x32xf32, #tpu.memory_space<vmem>>, %arg4: memref<32x2xbf16, #tpu.memory_space<vmem>>, %arg5: memref<16x2xf32, #tpu.memory_space<vmem>>) attributes {dimension_semantics = [#tpu.dimension_semantics<parallel>], iteration_bounds = array<i64: 1>, scalar_prefetch = 0 : i64, scratch_operands = 0 : i64, tpu.core_type = #tpu.core_type<tc>, window_params = [{transform_indices = @transform_0, window_bounds = array<i64: 16, 16>}, {pipeline_mode = #tpu.pipeline_mode<synchronous>, transform_indices = @transform_1, window_bounds = array<i64: 16, 32>}, {pipeline_mode = #tpu.pipeline_mode<synchronous>, transform_indices = @transform_2, window_bounds = array<i64: 2, 32>}, {pipeline_mode = #tpu.pipeline_mode<synchronous>, transform_indices = @transform_3, window_bounds = array<i64: 32, 2>}, {transform_indices = @transform_4, window_bounds = array<i64: 16, 2>}]} {
    %c0 = arith.constant 0 : index
    %c0_0 = arith.constant 0 : index
    %0 = vector.load %arg1[%c0, %c0_0] : memref<16x16xf32, #tpu.memory_space<vmem>>, vector<16x16xf32>
    %1 = arith.truncf %0 : vector<16x16xf32> to vector<16x16xbf16>
    %c0_1 = arith.constant 0 : index
    %c0_2 = arith.constant 0 : index
    %2 = vector.load %arg2[%c0_1, %c0_2] : memref<16x32xbf16, #tpu.memory_space<vmem>>, vector<16x32xbf16>
    %cst = arith.constant dense<0.000000e+00> : vector<16x32xf32>
    %3 = tpu.matmul %1, %2, %cst {dimension_numbers = #tpu.dot_dimension_numbers<[1], [0], [0], [1], [0, 0, 1, 1], [], []>} : vector<16x16xbf16>, vector<16x32xbf16>, vector<16x32xf32> -> vector<16x32xf32>
    %c0_3 = arith.constant 0 : index
    %c0_4 = arith.constant 0 : index
    %4 = vector.load %arg3[%c0_3, %c0_4] : memref<2x32xf32, #tpu.memory_space<vmem>>, vector<1x32xf32>
    %5 = vector.broadcast %4 : vector<1x32xf32> to vector<16x32xf32>
    %6 = arith.addf %3, %5 : vector<16x32xf32>
    %cst_5 = arith.constant 0.000000e+00 : f32
    %7 = vector.broadcast %cst_5 : f32 to vector<16x32xf32>
    %8 = arith.maximumf %6, %7 : vector<16x32xf32>
    %9 = arith.truncf %8 : vector<16x32xf32> to vector<16x32xbf16>
    %c0_6 = arith.constant 0 : index
    %c0_7 = arith.constant 0 : index
    %10 = vector.load %arg4[%c0_6, %c0_7] : memref<32x2xbf16, #tpu.memory_space<vmem>>, vector<32x2xbf16>
    %cst_8 = arith.constant dense<0.000000e+00> : vector<16x2xf32>
    %11 = tpu.matmul %9, %10, %cst_8 {dimension_numbers = #tpu.dot_dimension_numbers<[1], [0], [0], [1], [0, 0, 1, 1], [], []>} : vector<16x32xbf16>, vector<32x2xbf16>, vector<16x2xf32> -> vector<16x2xf32>
    %c1 = arith.constant 1 : index
    %c0_9 = arith.constant 0 : index
    %12 = vector.load %arg3[%c1, %c0_9] : memref<2x32xf32, #tpu.memory_space<vmem>>, vector<1x2xf32>
    %13 = vector.broadcast %12 : vector<1x2xf32> to vector<16x2xf32>
    %14 = arith.addf %11, %13 : vector<16x2xf32>
    %cst_10 = arith.constant 0.000000e+00 : f32
    %15 = vector.broadcast %cst_10 : f32 to vector<16x2xf32>
    %16 = arith.maximumf %14, %15 : vector<16x2xf32>
    %c0_11 = arith.constant 0 : index
    %c0_12 = arith.constant 0 : index
    %17 = vector.load %arg5[%c0_11, %c0_12] : memref<16x2xf32, #tpu.memory_space<vmem>>, vector<16x2xf32>
    tpu.vector_store %arg5[%c0_11, %c0_12], %16 {strides = array<i32>} : memref<16x2xf32, #tpu.memory_space<vmem>>, vector<16x2xf32>,
    return
  }
  func.func @transform_0(%arg0: i32) -> (i32, i32) {
    %c0_i32 = arith.constant 0 : i32
    %c0_i32_0 = arith.constant 0 : i32
    return %arg0, %c0_i32 : i32, i32
  }
  func.func @transform_1(%arg0: i32) -> (i32, i32) {
    %c0_i32 = arith.constant 0 : i32
    %c0_i32_0 = arith.constant 0 : i32
    %c0_i32_1 = arith.constant 0 : i32
    return %c0_i32, %c0_i32_0 : i32, i32
  }
  func.func @transform_2(%arg0: i32) -> (i32, i32) {
    %c0_i32 = arith.constant 0 : i32
    %c0_i32_0 = arith.constant 0 : i32
    %c0_i32_1 = arith.constant 0 : i32
    return %c0_i32, %c0_i32_0 : i32, i32
  }
  func.func @transform_3(%arg0: i32) -> (i32, i32) {
    %c0_i32 = arith.constant 0 : i32
    %c0_i32_0 = arith.constant 0 : i32
    %c0_i32_1 = arith.constant 0 : i32
    return %c0_i32, %c0_i32_0 : i32, i32
  }
  func.func @transform_4(%arg0: i32) -> (i32, i32) {
    %c0_i32 = arith.constant 0 : i32
    %c0_i32_0 = arith.constant 0 : i32
    return %arg0, %c0_i32 : i32, i32
  }
}

</mosaic_0001>

<llo_original>
// kernel: tpu_custom_call.1
$region0: #{tpu_custom_call.1}
  #allocation0 [shape = 'u32[]', space=smem, size = 0x4, offset = 0x4, fixed_abs, tag = 'smem constant byte address 0x4 - core index']
  #allocation1 [shape = 'u32[144,128]{1,0:T(1,128)}', space=vmem, size = 0x12000, scoped, tag = 'internal scratch']
  %s0 = inlined_call_operand.vmem [shape: f32[16,16], index: 0, kind: input, shape index: {}]
  %s1 = inlined_call_operand.hbm [shape: bf16[16,32], index: 1, kind: input, shape index: {}]
  %s2 = inlined_call_operand.vmem [shape: f32[2,32], index: 2, kind: input, shape index: {}]
  %s3 = inlined_call_operand.vmem [shape: bf16[32,2], index: 3, kind: input, shape index: {}]
  %s4 = inlined_call_operand.vmem [shape: f32[16,2], index: 4, kind: output, shape index: {}]
  %s5 = sld [smem:[#allocation0]]
  $region30: #{tpu_custom_call.1} parent=0
    _
  %s7 = ssub.s32 1, %s5
  %s8 = scalar_select 0, %s7, %s5
  $region1: #{tpu_custom_call.1} parent=0
    #allocation2 [shape = 'u8[4096]{0}', space=vmem, size = 0x1000, scoped, tag = 'input window, operand 1, single buffered']
    #allocation3 [shape = 's32[1]{0}', space=sflag, size = 0x4, scoped, tag = 'scoped memory for tpu_custom_call.1']
    %9 = vsyncpa [#allocation3], 0
    // Predicated region
    $region2: #{tpu_custom_call.1} parent=1 // pred_check
      _
    $region3: #{tpu_custom_call.1} parent=1 // pred_check_branch
      %11 = sbr.rel (0) target = $region5
    $region4: #{tpu_custom_call.1} parent=1 // pred_region
      _
    $region5: #{tpu_custom_call.1} parent=1 // pred_fallthru
      _
    // Predicated region
    $region6: #{tpu_custom_call.1} parent=1 // pred_check
      _
    $region7: #{tpu_custom_call.1} parent=1 // pred_check_branch
      %13 = sbr.rel (0) target = $region9
    $region8: #{tpu_custom_call.1} parent=1 // pred_region
      %s15 = ssub.s32 128, 128
      %16 = vsyncadd [#allocation3], %s15
      %s17 = sshll.u32 [#allocation2], 4
      %s18 = int_to_ptr.vmem [resolvable:$true] %s17
      %23 = dma.hbm_to_vmem [thread:$0]  %s1, 128, %s18, [#allocation3], 64, 64, 4
    $region9: #{tpu_custom_call.1} parent=1 // pred_fallthru
      _
    // Predicated region
    $region10: #{tpu_custom_call.1} parent=1 // pred_check
      _
    $region11: #{tpu_custom_call.1} parent=1 // pred_check_branch
      %25 = sbr.rel (0) target = $region13
    $region12: #{tpu_custom_call.1} parent=1 // pred_region
      _
    $region13: #{tpu_custom_call.1} parent=1 // pred_fallthru
      _
    // Predicated region
    $region14: #{tpu_custom_call.1} parent=1 // pred_check
      _
    $region15: #{tpu_custom_call.1} parent=1 // pred_check_branch
      %27 = sbr.rel (0) target = $region17
    $region16: #{tpu_custom_call.1} parent=1 // pred_region
      _
    $region17: #{tpu_custom_call.1} parent=1 // pred_fallthru
      _
    // Predicated region
    $region18: #{tpu_custom_call.1} parent=1 // pred_check
      _
    $region19: #{tpu_custom_call.1} parent=1 // pred_check_branch
      %29 = sbr.rel (0) target = $region21
    $region20: #{tpu_custom_call.1} parent=1 // pred_region
      %30 = dma.done [#allocation3], 128
    $region21: #{tpu_custom_call.1} parent=1 // pred_fallthru
      _
    %v32 = vld [vmem:[%s0] sm:$0xff]
    %v33 = vld [vmem:[%s0 + $0x8] sm:$0xff]
    %v34 = vpack.c.bf16 %v33, %v32
    %v35 = vld [vmem:[#allocation2] sm:$0xf]
    %v36 = vld [vmem:[#allocation2 + $0x4] sm:$0xf]
    %v37 = vld [vmem:[%s2] sm:$0x1]
    %v38 = vlaneseq
    %v39 = vshrl.u32 %v38, 7
    %v40 = vsub.s32 0, %v39
    %v41 = vrot.slane %v37, %v40
    %v44 = vunpack.c.l.b16 %v35
    %v45 = vunpack.c.l.b16 %v36
    %v46 = vpack.c.b16 %v45, %v44
    %vm48 = vcmask 130048
    %v50 = vsel %vm48, %v34, 0
    %52 = vmatprep.subr.bf16.mxu0 0
    %53 = vmatpush1.bf16.msra.mxu0 %v46
    %54 = vmatprep.subr.bf16.mxu0 0
    %55 = vmatpush1.bf16.msra.mxu0 0
    %56 = vmatprep.subr.bf16.mxu0 0
    %57 = vmatpush1.bf16.msra.mxu0 0
    %58 = vmatprep.subr.bf16.mxu0 0
    %59 = vmatpush1.bf16.msra.mxu0 0
    %60 = vmatprep.subr.bf16.mxu0 0
    %61 = vmatpush1.bf16.msra.mxu0 0
    %62 = vmatprep.subr.bf16.mxu0 0
    %63 = vmatpush1.bf16.msra.mxu0 0
    %64 = vmatprep.subr.bf16.mxu0 0
    %65 = vmatpush1.bf16.msra.mxu0 0
    %66 = vmatprep.subr.bf16.mxu0 0
    %67 = vmatpush1.bf16.msra.mxu0 0
    %68 = vmatprep.subr.bf16.mxu0 0
    %69 = vmatpush1.bf16.msra.mxu0 0
    %70 = vmatprep.subr.bf16.mxu0 0
    %71 = vmatpush1.bf16.msra.mxu0 0
    %72 = vmatprep.subr.bf16.mxu0 0
    %73 = vmatpush1.bf16.msra.mxu0 0
    %74 = vmatprep.subr.bf16.mxu0 0
    %75 = vmatpush1.bf16.msra.mxu0 0
    %76 = vmatprep.subr.bf16.mxu0 0
    %77 = vmatpush1.bf16.msra.mxu0 0
    %78 = vmatprep.subr.bf16.mxu0 0
    %79 = vmatpush1.bf16.msra.mxu0 0
    %80 = vmatprep.subr.bf16.mxu0 0
    %81 = vmatpush1.bf16.msra.mxu0 0
    %82 = vmatprep.subr.bf16.mxu0 0
    %83 = vmatpush1.bf16.msra.mxu0 0
    %84 = vmatprep.mubr.bf16.mxu0 0
    %85 = vmatmul.mubr.bf16.gmra.mrb[0].mxu0 %v50
    %v86 = vpop.f32.mrb[0].mxu0
    %v87 = vadd.f32 %v41, %v86
    %v88 = vpop.f32.mrb[0].mxu0
    %v89 = vpop.f32.mrb[0].mxu0
    %v90 = vadd.f32 %v41, %v89
    %v91 = vpop.f32.mrb[0].mxu0
    %92 = vdwg.mxu0
    %v93 = vmax.f32 %v87, 0.0
    %v94 = vmax.f32 %v90, 0.0
    %v95 = vpack.c.bf16 %v94, %v93
    %v96 = vld [vmem:[%s3] sm:$0xf]
    %v97 = vld [vmem:[%s3 + $0x4] sm:$0xf]
    %v98 = vld [vmem:[%s3 + $0x8] sm:$0xf]
    %v99 = vld [vmem:[%s3 + $0xc] sm:$0xf]
    %v100 = vld [vmem:[%s2 + $0x1] sm:$0x1]
    %v101 = vlaneseq
    %v102 = vshrl.u32 %v101, 7
    %v103 = vsub.s32 0, %v102
    %v104 = vrot.slane %v100, %v103
    %v109 = vunpack.c.l.b16 %v96
    %v110 = vunpack.c.l.b16 %v97
    %v111 = vunpack.c.l.b16 %v98
    %v112 = vunpack.c.l.b16 %v99
    %v113 = vpack.c.b16 %v110, %v109
    %v114 = vpack.c.b16 %v112, %v111
    %vm117 = vcmask 261120
    %v119 = vsel %vm117, %v95, 0
    %121 = vmatprep.subr.bf16.mxu0 0
    %122 = vmatpush1.bf16.msra.mxu0 %v113
    %123 = vmatprep.subr.bf16.mxu0 0
    %124 = vmatpush1.bf16.msra.mxu0 %v114
    %125 = vmatprep.subr.bf16.mxu0 0
    %126 = vmatpush1.bf16.msra.mxu0 0
    %127 = vmatprep.subr.bf16.mxu0 0
    %128 = vmatpush1.bf16.msra.mxu0 0
    %129 = vmatprep.subr.bf16.mxu0 0
    %130 = vmatpush1.bf16.msra.mxu0 0
    %131 = vmatprep.subr.bf16.mxu0 0
    %132 = vmatpush1.bf16.msra.mxu0 0
    %133 = vmatprep.subr.bf16.mxu0 0
    %134 = vmatpush1.bf16.msra.mxu0 0
    %135 = vmatprep.subr.bf16.mxu0 0
    %136 = vmatpush1.bf16.msra.mxu0 0
    %137 = vmatprep.subr.bf16.mxu0 0
    %138 = vmatpush1.bf16.msra.mxu0 0
    %139 = vmatprep.subr.bf16.mxu0 0
    %140 = vmatpush1.bf16.msra.mxu0 0
    %141 = vmatprep.subr.bf16.mxu0 0
    %142 = vmatpush1.bf16.msra.mxu0 0
    %143 = vmatprep.subr.bf16.mxu0 0
    %144 = vmatpush1.bf16.msra.mxu0 0
    %145 = vmatprep.subr.bf16.mxu0 0
    %146 = vmatpush1.bf16.msra.mxu0 0
    %147 = vmatprep.subr.bf16.mxu0 0
    %148 = vmatpush1.bf16.msra.mxu0 0
    %149 = vmatprep.subr.bf16.mxu0 0
    %150 = vmatpush1.bf16.msra.mxu0 0
    %151 = vmatprep.subr.bf16.mxu0 0
    %152 = vmatpush1.bf16.msra.mxu0 0
    %153 = vmatprep.mubr.bf16.mxu0 0
    %154 = vmatmul.mubr.bf16.gmra.mrb[0].mxu0 %v119
    %v155 = vpop.f32.mrb[0].mxu0
    %v156 = vadd.f32 %v104, %v155
    %v157 = vpop.f32.mrb[0].mxu0
    %v158 = vpop.f32.mrb[0].mxu0
    %v159 = vadd.f32 %v104, %v158
    %v160 = vpop.f32.mrb[0].mxu0
    %161 = vdwg.mxu0
    %v162 = vmax.f32 %v156, 0.0
    %v163 = vmax.f32 %v159, 0.0
    %vm164 = vcmask 15360
    %165 = vst.msk [vmem:[%s4] sm:$0xff] %vm164, %v162
    %166 = vst.msk [vmem:[%s4 + $0x8] sm:$0xff] %vm164, %v163
    // Predicated region
    $region22: #{tpu_custom_call.1} parent=1 // pred_check
      _
    $region23: #{tpu_custom_call.1} parent=1 // pred_check_branch
      %168 = sbr.rel (0) target = $region25
    $region24: #{tpu_custom_call.1} parent=1 // pred_region
      _
    $region25: #{tpu_custom_call.1} parent=1 // pred_fallthru
      _
    // Predicated region
    $region26: #{tpu_custom_call.1} parent=1 // pred_check
      _
    $region27: #{tpu_custom_call.1} parent=1 // pred_check_branch
      %170 = sbr.rel (0) target = $region29
    $region28: #{tpu_custom_call.1} parent=1 // pred_region
      _
    $region29: #{tpu_custom_call.1} parent=1 // pred_fallthru
      _
    %171 = vsyncpa [#allocation3], 1

</llo_original>
